<compile_context>
chip_gen: v5e
topology: v5e:2x2
jax: 0.10.0
libtpu: 0.0.40
codegen_flags: <defaults>
</compile_context>

<pallas_src>
import numpy as np
import jax
import jax.numpy as jnp
from jax.experimental import pallas as pl
from jax.experimental.pallas import tpu as pltpu


# ----------------------------------------------------------------------------
# Fused kernel: one-hot matmul (embedding + input proj, pre-folded)
#               -> LSTM recurrence -> MLP head.
# Operands:
#   tok_ref  : (T*B, 1) int32, time-major flattened tokens (row r = t*B + b)
#   len_ref  : (B, 1)   int32, sequence lengths
#   lstm_ref : (Vp + H, 4H) f32, rows [0,Vp) = emb@W_ih + b (zero-padded),
#                                rows [Vp, Vp+H) = W_hh
#   mlpw_ref : (H, 2H + O) f32, [w1 | w2 | w3]
#   mlpb_ref : (1, 2H + O) f32, [b1 | b2 | b3]
# ----------------------------------------------------------------------------
def _fused_kernel(tok_ref, len_ref, lstm_ref, mlpw_ref, mlpb_ref, o_ref):
    B = len_ref.shape[0]
    TB = tok_ref.shape[0]
    T = TB // B
    G = lstm_ref.shape[1]            # 4H
    H = G // 4
    Vp = lstm_ref.shape[0] - H       # padded vocab size
    O = mlpw_ref.shape[1] - 2 * H

    e_proj = lstm_ref[0:Vp, :]       # (Vp, 4H)  emb @ W_ih + b_lstm (pre-folded)
    w_hh = lstm_ref[Vp:Vp + H, :]    # (H, 4H)

    # ---- Embedding gather + hoisted input projection as ONE one-hot matmul.
    #      (bias already folded into e_proj; padded table rows are zero and
    #      are never selected since token ids < V).
    tok = tok_ref[...]                                                # (T*B, 1) i32
    vocab_ids = jax.lax.broadcasted_iota(jnp.int32, (TB, Vp), 1)      # (T*B, Vp)
    one_hot = (tok == vocab_ids).astype(jnp.float32)                  # (T*B, Vp)
    gates_in = jnp.dot(one_hot, e_proj,
                       preferred_element_type=jnp.float32)            # (T*B, 4H), time-major

    # ---- Hoisted pack_padded_sequence validity mask: valid_all[b, t] = t < len[b].
    lens = len_ref[...]                                               # (B, 1) i32
    step_ids = jax.lax.broadcasted_iota(jnp.int32, (B, T), 1)
    valid_all = step_ids < lens                                       # (B, T) bool

    h = jnp.zeros((B, H), jnp.float32)
    c = jnp.zeros((B, H), jnp.float32)

    # T is small & static -> fully unrolled recurrence (no grid / loop
    # overhead; equivalent to lax.fori_loop(..., unroll=True)).
    for t in range(T):
        # Contiguous 2-sublane static slice (time-major layout) + h @ W_hh.
        gates = gates_in[t * B:(t + 1) * B, :] + jnp.dot(
            h, w_hh, preferred_element_type=jnp.float32)              # (B, 4H)
        # Full-lane-width transcendentals (4H == 128 lanes), static lane slices.
        sig = jax.nn.sigmoid(gates)
        th = jnp.tanh(gates)
        i = sig[:, 0 * H:1 * H]
        f = sig[:, 1 * H:2 * H]
        g = th[:, 2 * H:3 * H]
        o = sig[:, 3 * H:4 * H]
        c_new = f * c + i * g
        h_new = o * jnp.tanh(c_new)
        valid = valid_all[:, t:t + 1]                                 # (B, 1) bool
        h = jnp.where(valid, h_new, h)
        c = jnp.where(valid, c_new, c)

    # ---- MLP head (dropout p=0.5 is identity in eval mode).
    w1 = mlpw_ref[:, 0:H]
    w2 = mlpw_ref[:, H:2 * H]
    w3 = mlpw_ref[:, 2 * H:2 * H + O]
    b1 = mlpb_ref[:, 0:H]
    b2 = mlpb_ref[:, H:2 * H]
    b3 = mlpb_ref[:, 2 * H:2 * H + O]

    y = jnp.maximum(jnp.dot(h, w1, preferred_element_type=jnp.float32) + b1, 0.0)
    y = jnp.maximum(jnp.dot(y, w2, preferred_element_type=jnp.float32) + b2, 0.0)
    o_ref[...] = jnp.dot(y, w3, preferred_element_type=jnp.float32) + b3


# ----------------------------------------------------------------------------
# One-time parameter packing (off the per-call path; all param-only math, so
# it is constant-foldable under jit as well).
# ----------------------------------------------------------------------------
def pack_params(params):
    V, _ = params["emb"].shape
    Vp = ((V + 7) // 8) * 8  # pad so W_hh starts on a sublane boundary
    # Pre-fold embedding @ W_ih and the LSTM bias into one (Vp, 4H) table.
    e_proj = params["emb"] @ params["w_ih"] + params["b_lstm"]         # (V, 4H)
    e_proj = jnp.pad(e_proj, ((0, Vp - V), (0, 0)))                    # (Vp, 4H)
    lstm_w = jnp.concatenate([e_proj, params["w_hh"]], axis=0)         # (Vp+H, 4H)
    mlp_w = jnp.concatenate([params["w1"], params["w2"], params["w3"]], axis=1)
    mlp_b = jnp.concatenate([params["b1"], params["b2"], params["b3"]], axis=1)
    return {"lstm_w": lstm_w.astype(jnp.float32),
            "mlp_w": mlp_w.astype(jnp.float32),
            "mlp_b": mlp_b.astype(jnp.float32)}


# ----------------------------------------------------------------------------
# Wrapper: single pallas_call, 5 VMEM-resident operands (~60 KB total).
# ----------------------------------------------------------------------------
def model3_forward(tokens, lengths, packed, hidden, out_channels):
    del hidden  # shapes are carried by the packed params
    B, T = tokens.shape
    # Time-major flattened tokens: row r = t*B + b.
    tok_flat = tokens.astype(jnp.int32).T.reshape(T * B, 1)
    lens2d = lengths.astype(jnp.int32).reshape(B, 1)

    vmem = pl.BlockSpec(memory_space=pltpu.MemorySpace.VMEM)
    return pl.pallas_call(
        _fused_kernel,
        out_shape=jax.ShapeDtypeStruct((B, out_channels), jnp.float32),
        in_specs=[vmem] * 5,
        out_specs=vmem,
    )(tok_flat, lens2d, packed["lstm_w"], packed["mlp_w"], packed["mlp_b"])


# ----------------------------------------------------------------------------
# Pure-JAX reference (unfolded / unpacked params) for validation.
# ----------------------------------------------------------------------------
def model3_ref(tokens, lengths, params, hidden, out_channels):
    emb = params["emb"]
    x = jnp.transpose(emb[tokens], (1, 0, 2))            # (T, B, E)
    T, B, _ = x.shape
    H = hidden
    h = jnp.zeros((B, H), jnp.float32)
    c = jnp.zeros((B, H), jnp.float32)
    for t in range(T):
        gates = x[t] @ params["w_ih"] + h @ params["w_hh"] + params["b_lstm"]
        i = jax.nn.sigmoid(gates[:, :H])
        f = jax.nn.sigmoid(gates[:, H:2 * H])
        g = jnp.tanh(gates[:, 2 * H:3 * H])
        o = jax.nn.sigmoid(gates[:, 3 * H:])
        c_new = f * c + i * g
        h_new = o * jnp.tanh(c_new)
        valid = (t < lengths)[:, None]
        h = jnp.where(valid, h_new, h)
        c = jnp.where(valid, c_new, c)
    y = jnp.maximum(h @ params["w1"] + params["b1"], 0.0)
    y = jnp.maximum(y @ params["w2"] + params["b2"], 0.0)
    return y @ params["w3"] + params["b3"]


if __name__ == "__main__":
    # Small shapes consistent with the module.
    B, T = 2, 8
    vocab_size, embed_dim = 50, 64
    hidden_channels, out_channels = 32, 8

    key = jax.random.PRNGKey(0)
    ks = jax.random.split(key, 10)

    H, E = hidden_channels, embed_dim
    s_lstm = 1.0 / np.sqrt(H)
    s_lin = 1.0 / np.sqrt(H)

    emb_tbl = jax.random.normal(ks[0], (vocab_size, E), jnp.float32)
    emb_tbl = emb_tbl.at[0].set(0.0)                     # padding_idx=0

    params = {
        "emb": emb_tbl,
        # LSTM weights pre-transposed to (in, 4H); gate order i,f,g,o columns.
        # b_lstm is the pre-summed b_ih + b_hh.
        "w_ih": jax.random.uniform(ks[1], (E, 4 * H), jnp.float32, -s_lstm, s_lstm),
        "w_hh": jax.random.uniform(ks[2], (H, 4 * H), jnp.float32, -s_lstm, s_lstm),
        "b_lstm": jax.random.uniform(ks[3], (1, 4 * H), jnp.float32, -s_lstm, s_lstm),
        # Linear layers (in, out) + (1, out) bias.
        "w1": jax.random.uniform(ks[4], (H, H), jnp.float32, -s_lin, s_lin),
        "b1": jax.random.uniform(ks[5], (1, H), jnp.float32, -s_lin, s_lin),
        "w2": jax.random.uniform(ks[6], (H, H), jnp.float32, -s_lin, s_lin),
        "b2": jax.random.uniform(ks[7], (1, H), jnp.float32, -s_lin, s_lin),
        "w3": jax.random.uniform(ks[8], (H, out_channels), jnp.float32, -s_lin, s_lin),
        "b3": jax.random.uniform(ks[9], (1, out_channels), jnp.float32, -s_lin, s_lin),
    }

    # lengths sorted descending (pack_padded_sequence default enforce_sorted=True)
    lengths = jnp.array([8, 5], dtype=jnp.int32)
    tok_key = jax.random.PRNGKey(123)
    tokens = jax.random.randint(tok_key, (B, T), 1, vocab_size, dtype=jnp.int32)
    # Zero-pad tokens past each sequence's length (padding_idx = 0).
    pad_mask = jnp.arange(T)[None, :] < lengths[:, None]
    tokens = jnp.where(pad_mask, tokens, 0)

    packed = pack_params(params)
    out = model3_forward(tokens, lengths, packed, hidden_channels, out_channels)
    out = jax.block_until_ready(out)

    ref = model3_ref(tokens, lengths, params, hidden_channels, out_channels)
    np.testing.assert_allclose(np.asarray(out), np.asarray(ref), rtol=1e-4, atol=1e-4)

    print("KERNEL_OK")
</pallas_src>

<mosaic_0001>
module attributes {stable_mosaic.version = 11 : i64} {
  func.func @_fused_kernel(%arg0: memref<16x1xi32, #tpu.memory_space<vmem>>, %arg1: memref<2x1xi32, #tpu.memory_space<vmem>>, %arg2: memref<88x128xf32, #tpu.memory_space<vmem>>, %arg3: memref<32x72xf32, #tpu.memory_space<vmem>>, %arg4: memref<1x72xf32, #tpu.memory_space<vmem>>, %arg5: memref<2x8xf32, #tpu.memory_space<vmem>>) attributes {dimension_semantics = [], scalar_prefetch = 0 : i64, scratch_operands = 0 : i64, tpu.core_type = #tpu.core_type<tc>} {
    %c0 = arith.constant 0 : index
    %c0_0 = arith.constant 0 : index
    %0 = vector.load %arg2[%c0, %c0_0] : memref<88x128xf32, #tpu.memory_space<vmem>>, vector<56x128xf32>
    %c56 = arith.constant 56 : index
    %c0_1 = arith.constant 0 : index
    %1 = vector.load %arg2[%c56, %c0_1] : memref<88x128xf32, #tpu.memory_space<vmem>>, vector<32x128xf32>
    %c0_2 = arith.constant 0 : index
    %c0_3 = arith.constant 0 : index
    %2 = vector.load %arg0[%c0_2, %c0_3] : memref<16x1xi32, #tpu.memory_space<vmem>>, vector<16x1xi32>
    %3 = tpu.iota {dimensions = array<i32: 1>} : vector<16x56xi32>
    %4 = vector.broadcast %2 : vector<16x1xi32> to vector<16x56xi32>
    %5 = arith.cmpi eq, %4, %3 : vector<16x56xi32>
    %6 = arith.extui %5 : vector<16x56xi1> to vector<16x56xi32>
    %7 = arith.sitofp %6 : vector<16x56xi32> to vector<16x56xf32>
    %cst = arith.constant dense<0.000000e+00> : vector<16x128xf32>
    %8 = tpu.matmul %7, %0, %cst {dimension_numbers = #tpu.dot_dimension_numbers<[1], [0], [0], [1], [0, 0, 1, 1], [], []>} : vector<16x56xf32>, vector<56x128xf32>, vector<16x128xf32> -> vector<16x128xf32>
    %c0_4 = arith.constant 0 : index
    %c0_5 = arith.constant 0 : index
    %9 = vector.load %arg1[%c0_4, %c0_5] : memref<2x1xi32, #tpu.memory_space<vmem>>, vector<2x1xi32>
    %10 = tpu.iota {dimensions = array<i32: 1>} : vector<2x8xi32>
    %11 = vector.broadcast %9 : vector<2x1xi32> to vector<2x8xi32>
    %12 = arith.cmpi slt, %10, %11 : vector<2x8xi32>
    %cst_6 = arith.constant 0.000000e+00 : f32
    %13 = vector.broadcast %cst_6 : f32 to vector<2x32xf32>
    %cst_7 = arith.constant 0.000000e+00 : f32
    %14 = vector.broadcast %cst_7 : f32 to vector<2x32xf32>
    %15 = vector.extract_strided_slice %8 {offsets = [0, 0], sizes = [2, 128], strides = [1, 1]} : vector<16x128xf32> to vector<2x128xf32>
    %cst_8 = arith.constant dense<0.000000e+00> : vector<2x128xf32>
    %16 = tpu.matmul %13, %1, %cst_8 {dimension_numbers = #tpu.dot_dimension_numbers<[1], [0], [0], [1], [0, 0, 1, 1], [], []>} : vector<2x32xf32>, vector<32x128xf32>, vector<2x128xf32> -> vector<2x128xf32>
    %17 = arith.addf %15, %16 : vector<2x128xf32>
    %18 = arith.negf %17 : vector<2x128xf32>
    %19 = math.exp %18 : vector<2x128xf32>
    %cst_9 = arith.constant 1.000000e+00 : f32
    %20 = vector.broadcast %cst_9 : f32 to vector<2x128xf32>
    %21 = arith.addf %20, %19 : vector<2x128xf32>
    %22 = arith.divf %20, %21 : vector<2x128xf32>
    %23 = math.tanh %17 : vector<2x128xf32>
    %24 = vector.extract_strided_slice %22 {offsets = [0, 0], sizes = [2, 32], strides = [1, 1]} : vector<2x128xf32> to vector<2x32xf32>
    %25 = vector.extract_strided_slice %22 {offsets = [0, 32], sizes = [2, 32], strides = [1, 1]} : vector<2x128xf32> to vector<2x32xf32>
    %26 = vector.extract_strided_slice %23 {offsets = [0, 64], sizes = [2, 32], strides = [1, 1]} : vector<2x128xf32> to vector<2x32xf32>
    %27 = vector.extract_strided_slice %22 {offsets = [0, 96], sizes = [2, 32], strides = [1, 1]} : vector<2x128xf32> to vector<2x32xf32>
    %28 = arith.mulf %25, %14 : vector<2x32xf32>
    %29 = arith.mulf %24, %26 : vector<2x32xf32>
    %30 = arith.addf %28, %29 : vector<2x32xf32>
    %31 = math.tanh %30 : vector<2x32xf32>
    %32 = arith.mulf %27, %31 : vector<2x32xf32>
    %33 = vector.extract_strided_slice %12 {offsets = [0, 0], sizes = [2, 1], strides = [1, 1]} : vector<2x8xi1> to vector<2x1xi1>
    %34 = vector.shape_cast %33 : vector<2x1xi1> to vector<2x1xi1>
    %35 = vector.broadcast %34 : vector<2x1xi1> to vector<2x32xi1>
    %36 = arith.select %35, %32, %13 : vector<2x32xi1>, vector<2x32xf32>
    %37 = vector.shape_cast %33 : vector<2x1xi1> to vector<2x1xi1>
    %38 = vector.broadcast %37 : vector<2x1xi1> to vector<2x32xi1>
    %39 = arith.select %38, %30, %14 : vector<2x32xi1>, vector<2x32xf32>
    %40 = vector.extract_strided_slice %8 {offsets = [2, 0], sizes = [2, 128], strides = [1, 1]} : vector<16x128xf32> to vector<2x128xf32>
    %cst_10 = arith.constant dense<0.000000e+00> : vector<2x128xf32>
    %41 = tpu.matmul %36, %1, %cst_10 {dimension_numbers = #tpu.dot_dimension_numbers<[1], [0], [0], [1], [0, 0, 1, 1], [], []>} : vector<2x32xf32>, vector<32x128xf32>, vector<2x128xf32> -> vector<2x128xf32>
    %42 = arith.addf %40, %41 : vector<2x128xf32>
    %43 = arith.negf %42 : vector<2x128xf32>
    %44 = math.exp %43 : vector<2x128xf32>
    %cst_11 = arith.constant 1.000000e+00 : f32
    %45 = vector.broadcast %cst_11 : f32 to vector<2x128xf32>
    %46 = arith.addf %45, %44 : vector<2x128xf32>
    %47 = arith.divf %45, %46 : vector<2x128xf32>
    %48 = math.tanh %42 : vector<2x128xf32>
    %49 = vector.extract_strided_slice %47 {offsets = [0, 0], sizes = [2, 32], strides = [1, 1]} : vector<2x128xf32> to vector<2x32xf32>
    %50 = vector.extract_strided_slice %47 {offsets = [0, 32], sizes = [2, 32], strides = [1, 1]} : vector<2x128xf32> to vector<2x32xf32>
    %51 = vector.extract_strided_slice %48 {offsets = [0, 64], sizes = [2, 32], strides = [1, 1]} : vector<2x128xf32> to vector<2x32xf32>
    %52 = vector.extract_strided_slice %47 {offsets = [0, 96], sizes = [2, 32], strides = [1, 1]} : vector<2x128xf32> to vector<2x32xf32>
    %53 = arith.mulf %50, %39 : vector<2x32xf32>
    %54 = arith.mulf %49, %51 : vector<2x32xf32>
    %55 = arith.addf %53, %54 : vector<2x32xf32>
    %56 = math.tanh %55 : vector<2x32xf32>
    %57 = arith.mulf %52, %56 : vector<2x32xf32>
    %58 = vector.extract_strided_slice %12 {offsets = [0, 1], sizes = [2, 1], strides = [1, 1]} : vector<2x8xi1> to vector<2x1xi1>
    %59 = vector.shape_cast %58 : vector<2x1xi1> to vector<2x1xi1>
    %60 = vector.broadcast %59 : vector<2x1xi1> to vector<2x32xi1>
    %61 = arith.select %60, %57, %36 : vector<2x32xi1>, vector<2x32xf32>
    %62 = vector.shape_cast %58 : vector<2x1xi1> to vector<2x1xi1>
    %63 = vector.broadcast %62 : vector<2x1xi1> to vector<2x32xi1>
    %64 = arith.select %63, %55, %39 : vector<2x32xi1>, vector<2x32xf32>
    %65 = vector.extract_strided_slice %8 {offsets = [4, 0], sizes = [2, 128], strides = [1, 1]} : vector<16x128xf32> to vector<2x128xf32>
    %cst_12 = arith.constant dense<0.000000e+00> : vector<2x128xf32>
    %66 = tpu.matmul %61, %1, %cst_12 {dimension_numbers = #tpu.dot_dimension_numbers<[1], [0], [0], [1], [0, 0, 1, 1], [], []>} : vector<2x32xf32>, vector<32x128xf32>, vector<2x128xf32> -> vector<2x128xf32>
    %67 = arith.addf %65, %66 : vector<2x128xf32>
    %68 = arith.negf %67 : vector<2x128xf32>
    %69 = math.exp %68 : vector<2x128xf32>
    %cst_13 = arith.constant 1.000000e+00 : f32
    %70 = vector.broadcast %cst_13 : f32 to vector<2x128xf32>
    %71 = arith.addf %70, %69 : vector<2x128xf32>
    %72 = arith.divf %70, %71 : vector<2x128xf32>
    %73 = math.tanh %67 : vector<2x128xf32>
    %74 = vector.extract_strided_slice %72 {offsets = [0, 0], sizes = [2, 32], strides = [1, 1]} : vector<2x128xf32> to vector<2x32xf32>
    %75 = vector.extract_strided_slice %72 {offsets = [0, 32], sizes = [2, 32], strides = [1, 1]} : vector<2x128xf32> to vector<2x32xf32>
    %76 = vector.extract_strided_slice %73 {offsets = [0, 64], sizes = [2, 32], strides = [1, 1]} : vector<2x128xf32> to vector<2x32xf32>
    %77 = vector.extract_strided_slice %72 {offsets = [0, 96], sizes = [2, 32], strides = [1, 1]} : vector<2x128xf32> to vector<2x32xf32>
    %78 = arith.mulf %75, %64 : vector<2x32xf32>
    %79 = arith.mulf %74, %76 : vector<2x32xf32>
    %80 = arith.addf %78, %79 : vector<2x32xf32>
    %81 = math.tanh %80 : vector<2x32xf32>
    %82 = arith.mulf %77, %81 : vector<2x32xf32>
    %83 = vector.extract_strided_slice %12 {offsets = [0, 2], sizes = [2, 1], strides = [1, 1]} : vector<2x8xi1> to vector<2x1xi1>
    %84 = vector.shape_cast %83 : vector<2x1xi1> to vector<2x1xi1>
    %85 = vector.broadcast %84 : vector<2x1xi1> to vector<2x32xi1>
    %86 = arith.select %85, %82, %61 : vector<2x32xi1>, vector<2x32xf32>
    %87 = vector.shape_cast %83 : vector<2x1xi1> to vector<2x1xi1>
    %88 = vector.broadcast %87 : vector<2x1xi1> to vector<2x32xi1>
    %89 = arith.select %88, %80, %64 : vector<2x32xi1>, vector<2x32xf32>
    %90 = vector.extract_strided_slice %8 {offsets = [6, 0], sizes = [2, 128], strides = [1, 1]} : vector<16x128xf32> to vector<2x128xf32>
    %cst_14 = arith.constant dense<0.000000e+00> : vector<2x128xf32>
    %91 = tpu.matmul %86, %1, %cst_14 {dimension_numbers = #tpu.dot_dimension_numbers<[1], [0], [0], [1], [0, 0, 1, 1], [], []>} : vector<2x32xf32>, vector<32x128xf32>, vector<2x128xf32> -> vector<2x128xf32>
    %92 = arith.addf %90, %91 : vector<2x128xf32>
    %93 = arith.negf %92 : vector<2x128xf32>
    %94 = math.exp %93 : vector<2x128xf32>
    %cst_15 = arith.constant 1.000000e+00 : f32
    %95 = vector.broadcast %cst_15 : f32 to vector<2x128xf32>
    %96 = arith.addf %95, %94 : vector<2x128xf32>
    %97 = arith.divf %95, %96 : vector<2x128xf32>
    %98 = math.tanh %92 : vector<2x128xf32>
    %99 = vector.extract_strided_slice %97 {offsets = [0, 0], sizes = [2, 32], strides = [1, 1]} : vector<2x128xf32> to vector<2x32xf32>
    %100 = vector.extract_strided_slice %97 {offsets = [0, 32], sizes = [2, 32], strides = [1, 1]} : vector<2x128xf32> to vector<2x32xf32>
    %101 = vector.extract_strided_slice %98 {offsets = [0, 64], sizes = [2, 32], strides = [1, 1]} : vector<2x128xf32> to vector<2x32xf32>
    %102 = vector.extract_strided_slice %97 {offsets = [0, 96], sizes = [2, 32], strides = [1, 1]} : vector<2x128xf32> to vector<2x32xf32>
    %103 = arith.mulf %100, %89 : vector<2x32xf32>
    %104 = arith.mulf %99, %101 : vector<2x32xf32>
    %105 = arith.addf %103, %104 : vector<2x32xf32>
    %106 = math.tanh %105 : vector<2x32xf32>
    %107 = arith.mulf %102, %106 : vector<2x32xf32>
    %108 = vector.extract_strided_slice %12 {offsets = [0, 3], sizes = [2, 1], strides = [1, 1]} : vector<2x8xi1> to vector<2x1xi1>
    %109 = vector.shape_cast %108 : vector<2x1xi1> to vector<2x1xi1>
    %110 = vector.broadcast %109 : vector<2x1xi1> to vector<2x32xi1>
    %111 = arith.select %110, %107, %86 : vector<2x32xi1>, vector<2x32xf32>
    %112 = vector.shape_cast %108 : vector<2x1xi1> to vector<2x1xi1>
    %113 = vector.broadcast %112 : vector<2x1xi1> to vector<2x32xi1>
    %114 = arith.select %113, %105, %89 : vector<2x32xi1>, vector<2x32xf32>
    %115 = vector.extract_strided_slice %8 {offsets = [8, 0], sizes = [2, 128], strides = [1, 1]} : vector<16x128xf32> to vector<2x128xf32>
    %cst_16 = arith.constant dense<0.000000e+00> : vector<2x128xf32>
    %116 = tpu.matmul %111, %1, %cst_16 {dimension_numbers = #tpu.dot_dimension_numbers<[1], [0], [0], [1], [0, 0, 1, 1], [], []>} : vector<2x32xf32>, vector<32x128xf32>, vector<2x128xf32> -> vector<2x128xf32>
    %117 = arith.addf %115, %116 : vector<2x128xf32>
    %118 = arith.negf %117 : vector<2x128xf32>
    %119 = math.exp %118 : vector<2x128xf32>
    %cst_17 = arith.constant 1.000000e+00 : f32
    %120 = vector.broadcast %cst_17 : f32 to vector<2x128xf32>
    %121 = arith.addf %120, %119 : vector<2x128xf32>
    %122 = arith.divf %120, %121 : vector<2x128xf32>
    %123 = math.tanh %117 : vector<2x128xf32>
    %124 = vector.extract_strided_slice %122 {offsets = [0, 0], sizes = [2, 32], strides = [1, 1]} : vector<2x128xf32> to vector<2x32xf32>
    %125 = vector.extract_strided_slice %122 {offsets = [0, 32], sizes = [2, 32], strides = [1, 1]} : vector<2x128xf32> to vector<2x32xf32>
    %126 = vector.extract_strided_slice %123 {offsets = [0, 64], sizes = [2, 32], strides = [1, 1]} : vector<2x128xf32> to vector<2x32xf32>
    %127 = vector.extract_strided_slice %122 {offsets = [0, 96], sizes = [2, 32], strides = [1, 1]} : vector<2x128xf32> to vector<2x32xf32>
    %128 = arith.mulf %125, %114 : vector<2x32xf32>
    %129 = arith.mulf %124, %126 : vector<2x32xf32>
    %130 = arith.addf %128, %129 : vector<2x32xf32>
    %131 = math.tanh %130 : vector<2x32xf32>
    %132 = arith.mulf %127, %131 : vector<2x32xf32>
    %133 = vector.extract_strided_slice %12 {offsets = [0, 4], sizes = [2, 1], strides = [1, 1]} : vector<2x8xi1> to vector<2x1xi1>
    %134 = vector.shape_cast %133 : vector<2x1xi1> to vector<2x1xi1>
    %135 = vector.broadcast %134 : vector<2x1xi1> to vector<2x32xi1>
    %136 = arith.select %135, %132, %111 : vector<2x32xi1>, vector<2x32xf32>
    %137 = vector.shape_cast %133 : vector<2x1xi1> to vector<2x1xi1>
    %138 = vector.broadcast %137 : vector<2x1xi1> to vector<2x32xi1>
    %139 = arith.select %138, %130, %114 : vector<2x32xi1>, vector<2x32xf32>
    %140 = vector.extract_strided_slice %8 {offsets = [10, 0], sizes = [2, 128], strides = [1, 1]} : vector<16x128xf32> to vector<2x128xf32>
    %cst_18 = arith.constant dense<0.000000e+00> : vector<2x128xf32>
    %141 = tpu.matmul %136, %1, %cst_18 {dimension_numbers = #tpu.dot_dimension_numbers<[1], [0], [0], [1], [0, 0, 1, 1], [], []>} : vector<2x32xf32>, vector<32x128xf32>, vector<2x128xf32> -> vector<2x128xf32>
    %142 = arith.addf %140, %141 : vector<2x128xf32>
    %143 = arith.negf %142 : vector<2x128xf32>
    %144 = math.exp %143 : vector<2x128xf32>
    %cst_19 = arith.constant 1.000000e+00 : f32
    %145 = vector.broadcast %cst_19 : f32 to vector<2x128xf32>
    %146 = arith.addf %145, %144 : vector<2x128xf32>
    %147 = arith.divf %145, %146 : vector<2x128xf32>
    %148 = math.tanh %142 : vector<2x128xf32>
    %149 = vector.extract_strided_slice %147 {offsets = [0, 0], sizes = [2, 32], strides = [1, 1]} : vector<2x128xf32> to vector<2x32xf32>
    %150 = vector.extract_strided_slice %147 {offsets = [0, 32], sizes = [2, 32], strides = [1, 1]} : vector<2x128xf32> to vector<2x32xf32>
    %151 = vector.extract_strided_slice %148 {offsets = [0, 64], sizes = [2, 32], strides = [1, 1]} : vector<2x128xf32> to vector<2x32xf32>
    %152 = vector.extract_strided_slice %147 {offsets = [0, 96], sizes = [2, 32], strides = [1, 1]} : vector<2x128xf32> to vector<2x32xf32>
    %153 = arith.mulf %150, %139 : vector<2x32xf32>
    %154 = arith.mulf %149, %151 : vector<2x32xf32>
    %155 = arith.addf %153, %154 : vector<2x32xf32>
    %156 = math.tanh %155 : vector<2x32xf32>
    %157 = arith.mulf %152, %156 : vector<2x32xf32>
    %158 = vector.extract_strided_slice %12 {offsets = [0, 5], sizes = [2, 1], strides = [1, 1]} : vector<2x8xi1> to vector<2x1xi1>
    %159 = vector.shape_cast %158 : vector<2x1xi1> to vector<2x1xi1>
    %160 = vector.broadcast %159 : vector<2x1xi1> to vector<2x32xi1>
    %161 = arith.select %160, %157, %136 : vector<2x32xi1>, vector<2x32xf32>
    %162 = vector.shape_cast %158 : vector<2x1xi1> to vector<2x1xi1>
    %163 = vector.broadcast %162 : vector<2x1xi1> to vector<2x32xi1>
    %164 = arith.select %163, %155, %139 : vector<2x32xi1>, vector<2x32xf32>
    %165 = vector.extract_strided_slice %8 {offsets = [12, 0], sizes = [2, 128], strides = [1, 1]} : vector<16x128xf32> to vector<2x128xf32>
    %cst_20 = arith.constant dense<0.000000e+00> : vector<2x128xf32>
    %166 = tpu.matmul %161, %1, %cst_20 {dimension_numbers = #tpu.dot_dimension_numbers<[1], [0], [0], [1], [0, 0, 1, 1], [], []>} : vector<2x32xf32>, vector<32x128xf32>, vector<2x128xf32> -> vector<2x128xf32>
    %167 = arith.addf %165, %166 : vector<2x128xf32>
    %168 = arith.negf %167 : vector<2x128xf32>
    %169 = math.exp %168 : vector<2x128xf32>
    %cst_21 = arith.constant 1.000000e+00 : f32
    %170 = vector.broadcast %cst_21 : f32 to vector<2x128xf32>
    %171 = arith.addf %170, %169 : vector<2x128xf32>
    %172 = arith.divf %170, %171 : vector<2x128xf32>
    %173 = math.tanh %167 : vector<2x128xf32>
    %174 = vector.extract_strided_slice %172 {offsets = [0, 0], sizes = [2, 32], strides = [1, 1]} : vector<2x128xf32> to vector<2x32xf32>
    %175 = vector.extract_strided_slice %172 {offsets = [0, 32], sizes = [2, 32], strides = [1, 1]} : vector<2x128xf32> to vector<2x32xf32>
    %176 = vector.extract_strided_slice %173 {offsets = [0, 64], sizes = [2, 32], strides = [1, 1]} : vector<2x128xf32> to vector<2x32xf32>
    %177 = vector.extract_strided_slice %172 {offsets = [0, 96], sizes = [2, 32], strides = [1, 1]} : vector<2x128xf32> to vector<2x32xf32>
    %178 = arith.mulf %175, %164 : vector<2x32xf32>
    %179 = arith.mulf %174, %176 : vector<2x32xf32>
    %180 = arith.addf %178, %179 : vector<2x32xf32>
    %181 = math.tanh %180 : vector<2x32xf32>
    %182 = arith.mulf %177, %181 : vector<2x32xf32>
    %183 = vector.extract_strided_slice %12 {offsets = [0, 6], sizes = [2, 1], strides = [1, 1]} : vector<2x8xi1> to vector<2x1xi1>
    %184 = vector.shape_cast %183 : vector<2x1xi1> to vector<2x1xi1>
    %185 = vector.broadcast %184 : vector<2x1xi1> to vector<2x32xi1>
    %186 = arith.select %185, %182, %161 : vector<2x32xi1>, vector<2x32xf32>
    %187 = vector.shape_cast %183 : vector<2x1xi1> to vector<2x1xi1>
    %188 = vector.broadcast %187 : vector<2x1xi1> to vector<2x32xi1>
    %189 = arith.select %188, %180, %164 : vector<2x32xi1>, vector<2x32xf32>
    %190 = vector.extract_strided_slice %8 {offsets = [14, 0], sizes = [2, 128], strides = [1, 1]} : vector<16x128xf32> to vector<2x128xf32>
    %cst_22 = arith.constant dense<0.000000e+00> : vector<2x128xf32>
    %191 = tpu.matmul %186, %1, %cst_22 {dimension_numbers = #tpu.dot_dimension_numbers<[1], [0], [0], [1], [0, 0, 1, 1], [], []>} : vector<2x32xf32>, vector<32x128xf32>, vector<2x128xf32> -> vector<2x128xf32>
    %192 = arith.addf %190, %191 : vector<2x128xf32>
    %193 = arith.negf %192 : vector<2x128xf32>
    %194 = math.exp %193 : vector<2x128xf32>
    %cst_23 = arith.constant 1.000000e+00 : f32
    %195 = vector.broadcast %cst_23 : f32 to vector<2x128xf32>
    %196 = arith.addf %195, %194 : vector<2x128xf32>
    %197 = arith.divf %195, %196 : vector<2x128xf32>
    %198 = math.tanh %192 : vector<2x128xf32>
    %199 = vector.extract_strided_slice %197 {offsets = [0, 0], sizes = [2, 32], strides = [1, 1]} : vector<2x128xf32> to vector<2x32xf32>
    %200 = vector.extract_strided_slice %197 {offsets = [0, 32], sizes = [2, 32], strides = [1, 1]} : vector<2x128xf32> to vector<2x32xf32>
    %201 = vector.extract_strided_slice %198 {offsets = [0, 64], sizes = [2, 32], strides = [1, 1]} : vector<2x128xf32> to vector<2x32xf32>
    %202 = vector.extract_strided_slice %197 {offsets = [0, 96], sizes = [2, 32], strides = [1, 1]} : vector<2x128xf32> to vector<2x32xf32>
    %203 = arith.mulf %200, %189 : vector<2x32xf32>
    %204 = arith.mulf %199, %201 : vector<2x32xf32>
    %205 = arith.addf %203, %204 : vector<2x32xf32>
    %206 = math.tanh %205 : vector<2x32xf32>
    %207 = arith.mulf %202, %206 : vector<2x32xf32>
    %208 = vector.extract_strided_slice %12 {offsets = [0, 7], sizes = [2, 1], strides = [1, 1]} : vector<2x8xi1> to vector<2x1xi1>
    %209 = vector.shape_cast %208 : vector<2x1xi1> to vector<2x1xi1>
    %210 = vector.broadcast %209 : vector<2x1xi1> to vector<2x32xi1>
    %211 = arith.select %210, %207, %186 : vector<2x32xi1>, vector<2x32xf32>
    %c0_24 = arith.constant 0 : index
    %c0_25 = arith.constant 0 : index
    %212 = vector.load %arg3[%c0_24, %c0_25] : memref<32x72xf32, #tpu.memory_space<vmem>>, vector<32x32xf32>
    %c0_26 = arith.constant 0 : index
    %c32 = arith.constant 32 : index
    %213 = vector.load %arg3[%c0_26, %c32] : memref<32x72xf32, #tpu.memory_space<vmem>>, vector<32x32xf32>
    %c0_27 = arith.constant 0 : index
    %c64 = arith.constant 64 : index
    %214 = vector.load %arg3[%c0_27, %c64] : memref<32x72xf32, #tpu.memory_space<vmem>>, vector<32x8xf32>
    %c0_28 = arith.constant 0 : index
    %c0_29 = arith.constant 0 : index
    %215 = vector.load %arg4[%c0_28, %c0_29] : memref<1x72xf32, #tpu.memory_space<vmem>>, vector<1x32xf32>
    %c0_30 = arith.constant 0 : index
    %c32_31 = arith.constant 32 : index
    %216 = vector.load %arg4[%c0_30, %c32_31] : memref<1x72xf32, #tpu.memory_space<vmem>>, vector<1x32xf32>
    %c0_32 = arith.constant 0 : index
    %c64_33 = arith.constant 64 : index
    %217 = vector.load %arg4[%c0_32, %c64_33] : memref<1x72xf32, #tpu.memory_space<vmem>>, vector<1x8xf32>
    %cst_34 = arith.constant dense<0.000000e+00> : vector<2x32xf32>
    %218 = tpu.matmul %211, %212, %cst_34 {dimension_numbers = #tpu.dot_dimension_numbers<[1], [0], [0], [1], [0, 0, 1, 1], [], []>} : vector<2x32xf32>, vector<32x32xf32>, vector<2x32xf32> -> vector<2x32xf32>
    %219 = vector.broadcast %215 : vector<1x32xf32> to vector<2x32xf32>
    %220 = arith.addf %218, %219 : vector<2x32xf32>
    %cst_35 = arith.constant 0.000000e+00 : f32
    %221 = vector.broadcast %cst_35 : f32 to vector<2x32xf32>
    %222 = arith.maximumf %220, %221 : vector<2x32xf32>
    %cst_36 = arith.constant dense<0.000000e+00> : vector<2x32xf32>
    %223 = tpu.matmul %222, %213, %cst_36 {dimension_numbers = #tpu.dot_dimension_numbers<[1], [0], [0], [1], [0, 0, 1, 1], [], []>} : vector<2x32xf32>, vector<32x32xf32>, vector<2x32xf32> -> vector<2x32xf32>
    %224 = vector.broadcast %216 : vector<1x32xf32> to vector<2x32xf32>
    %225 = arith.addf %223, %224 : vector<2x32xf32>
    %cst_37 = arith.constant 0.000000e+00 : f32
    %226 = vector.broadcast %cst_37 : f32 to vector<2x32xf32>
    %227 = arith.maximumf %225, %226 : vector<2x32xf32>
    %cst_38 = arith.constant dense<0.000000e+00> : vector<2x8xf32>
    %228 = tpu.matmul %227, %214, %cst_38 {dimension_numbers = #tpu.dot_dimension_numbers<[1], [0], [0], [1], [0, 0, 1, 1], [], []>} : vector<2x32xf32>, vector<32x8xf32>, vector<2x8xf32> -> vector<2x8xf32>
    %229 = vector.broadcast %217 : vector<1x8xf32> to vector<2x8xf32>
    %230 = arith.addf %228, %229 : vector<2x8xf32>
    %c0_39 = arith.constant 0 : index
    %c0_40 = arith.constant 0 : index
    %231 = vector.load %arg5[%c0_39, %c0_40] : memref<2x8xf32, #tpu.memory_space<vmem>>, vector<2x8xf32>
    tpu.vector_store %arg5[%c0_39, %c0_40], %230 {strides = array<i32>} : memref<2x8xf32, #tpu.memory_space<vmem>>, vector<2x8xf32>,
    return
  }
}

</mosaic_0001>

<llo_original>
// kernel: tpu_custom_call.1
$region0: #{tpu_custom_call.1}
  #allocation0 [shape = 'u32[]', space=smem, size = 0x4, offset = 0x4, fixed_abs, tag = 'smem constant byte address 0x4 - core index']
  #allocation1 [shape = 'u32[72,128]{1,0:T(1,128)}', space=vmem, size = 0x9000, scoped, tag = 'internal scratch']
  %s0 = inlined_call_operand.vmem [shape: s32[16,1], index: 0, kind: input, shape index: {}]
  %s1 = inlined_call_operand.vmem [shape: s32[2,1], index: 1, kind: input, shape index: {}]
  %s2 = inlined_call_operand.hbm [shape: f32[88,128], index: 2, kind: input, shape index: {}]
  %s3 = inlined_call_operand.hbm [shape: f32[32,72], index: 3, kind: input, shape index: {}]
  %s4 = inlined_call_operand.vmem [shape: f32[1,72], index: 4, kind: input, shape index: {}]
  %s5 = inlined_call_operand.hbm [shape: f32[2,8], index: 5, kind: output, shape index: {}]
  %s6 = sld [smem:[#allocation0]]
  $region38: #{tpu_custom_call.1} parent=0
    _
  %s8 = ssub.s32 1, %s6
  %s9 = scalar_select 0, %s8, %s6
  $region1: #{tpu_custom_call.1} parent=0
    #allocation2 [shape = 'u8[45056]{0}', space=vmem, size = 0xb000, scoped, tag = 'input window, operand 2, single buffered']
    #allocation3 [shape = 's32[1]{0}', space=sflag, size = 0x4, scoped, tag = 'scoped memory for tpu_custom_call.1']
    #allocation4 [shape = 's32[1]{0}', space=sflag, size = 0x4, scoped, tag = 'scoped memory for tpu_custom_call.1']
    #allocation5 [shape = 'u8[16384]{0}', space=vmem, size = 0x4000, scoped, tag = 'input window, operand 3, single buffered']
    #allocation6 [shape = 's32[1]{0}', space=sflag, size = 0x4, scoped, tag = 'scoped memory for tpu_custom_call.1']
    #allocation7 [shape = 'u8[1024]{0}', space=vmem, size = 0x400, scoped, tag = 'output window, operand 0, single buffered']
    %10 = vsyncpa [#allocation3], 0
    %11 = vsyncpa [#allocation6], 0
    %12 = vsyncpa [#allocation4], 0
    // Predicated region
    $region2: #{tpu_custom_call.1} parent=1 // pred_check
      _
    $region3: #{tpu_custom_call.1} parent=1 // pred_check_branch
      %14 = sbr.rel (0) target = $region5
    $region4: #{tpu_custom_call.1} parent=1 // pred_region
      _
    $region5: #{tpu_custom_call.1} parent=1 // pred_fallthru
      _
    // Predicated region
    $region6: #{tpu_custom_call.1} parent=1 // pred_check
      _
    $region7: #{tpu_custom_call.1} parent=1 // pred_check_branch
      %16 = sbr.rel (0) target = $region9
    $region8: #{tpu_custom_call.1} parent=1 // pred_region
      _
    $region9: #{tpu_custom_call.1} parent=1 // pred_fallthru
      _
    // Predicated region
    $region10: #{tpu_custom_call.1} parent=1 // pred_check
      _
    $region11: #{tpu_custom_call.1} parent=1 // pred_check_branch
      %18 = sbr.rel (0) target = $region13
    $region12: #{tpu_custom_call.1} parent=1 // pred_region
      %20 = vsyncadd [#allocation3], 0
      %s21 = sshll.u32 %s2, 4
      %s22 = int_to_ptr.hbm [resolvable:$true] %s21
      %s23 = sshll.u32 [#allocation2], 4
      %s24 = int_to_ptr.vmem [resolvable:$true] %s23
      %29 = dma.hbm_to_vmem [thread:$0]  %s22, 1408, %s24, [#allocation3], 128, 128, 8
    $region13: #{tpu_custom_call.1} parent=1 // pred_fallthru
      _
    // Predicated region
    $region14: #{tpu_custom_call.1} parent=1 // pred_check
      _
    $region15: #{tpu_custom_call.1} parent=1 // pred_check_branch
      %31 = sbr.rel (0) target = $region17
    $region16: #{tpu_custom_call.1} parent=1 // pred_region
      %33 = vsyncadd [#allocation6], 0
      %s34 = sshll.u32 %s3, 4
      %s35 = int_to_ptr.hbm [resolvable:$true] %s34
      %s36 = sshll.u32 [#allocation5], 4
      %s37 = int_to_ptr.vmem [resolvable:$true] %s36
      %42 = dma.hbm_to_vmem [thread:$0]  %s35, 512, %s37, [#allocation6], 128, 128, 8
    $region17: #{tpu_custom_call.1} parent=1 // pred_fallthru
      _
    // Predicated region
    $region18: #{tpu_custom_call.1} parent=1 // pred_check
      _
    $region19: #{tpu_custom_call.1} parent=1 // pred_check_branch
      %44 = sbr.rel (0) target = $region21
    $region20: #{tpu_custom_call.1} parent=1 // pred_region
      _
    $region21: #{tpu_custom_call.1} parent=1 // pred_fallthru
      _
    // Predicated region
    $region22: #{tpu_custom_call.1} parent=1 // pred_check
      _
    $region23: #{tpu_custom_call.1} parent=1 // pred_check_branch
      %46 = sbr.rel (0) target = $region25
    $region24: #{tpu_custom_call.1} parent=1 // pred_region
      %48 = dma.done [#allocation3], 1408
    $region25: #{tpu_custom_call.1} parent=1 // pred_fallthru
      _
    // Predicated region
    $region26: #{tpu_custom_call.1} parent=1 // pred_check
      _
    $region27: #{tpu_custom_call.1} parent=1 // pred_check_branch
      %50 = sbr.rel (0) target = $region29
    $region28: #{tpu_custom_call.1} parent=1 // pred_region
      %52 = dma.done [#allocation6], 512
    $region29: #{tpu_custom_call.1} parent=1 // pred_fallthru
      _
    %v53 = vld [vmem:[#allocation2] sm:$0xff]
    %v54 = vld [vmem:[#allocation2 + $0x8] sm:$0xff]
    %v55 = vld [vmem:[#allocation2 + $0x10] sm:$0xff]
    %v56 = vld [vmem:[#allocation2 + $0x18] sm:$0xff]
    %v57 = vld [vmem:[#allocation2 + $0x20] sm:$0xff]
    %v58 = vld [vmem:[#allocation2 + $0x28] sm:$0xff]
    %v59 = vld [vmem:[#allocation2 + $0x30] sm:$0xff]
    %v60 = vld [vmem:[#allocation2 + $0x38] sm:$0xff]
    %v61 = vld [vmem:[#allocation2 + $0x40] sm:$0xff]
    %v62 = vld [vmem:[#allocation2 + $0x48] sm:$0xff]
    %v63 = vld [vmem:[#allocation2 + $0x50] sm:$0xff]
    %v64 = vld [vmem:[%s0] sm:$0xff]
    %v65 = vld [vmem:[%s0 + $0x8] sm:$0xff]
    %v66 = vlaneseq
    %v67 = vand.u32 %v66, 127
    %68 = vset.pattern.permute.xlu0 0
    %69 = vperm.xlu0 %68, %v64
    %v70 = vpop.permute.xlu0 %69
    %71 = vset.pattern.permute.xlu0 0
    %72 = vperm.xlu0 %71, %v65
    %v73 = vpop.permute.xlu0 %72
    %vm74 = vcmp.eq.s32.totalorder %v70, %v67
    %vm75 = vcmp.eq.s32.totalorder %v73, %v67
    %v76 = vsel %vm74, 1, 0
    %v77 = vsel %vm75, 1, 0
    %v78 = vcvt.s32.f32 %v76
    %v79 = vcvt.s32.f32 %v77
    %vm80 = vcmask 457728
    %v82 = vsel %vm80, %v78, 0
    %v85 = vsel %vm80, %v79, 0
    %87 = vmatpush.msra.mxu0 0.0
    %88 = vmatpush.msra.mxu0 0.0
    %89 = vmatpush.msra.mxu0 0.0
    %90 = vmatpush.msra.mxu0 0.0
    %91 = vmatpush.msra.mxu0 0.0
    %92 = vmatpush.msra.mxu0 0.0
    %93 = vmatpush.msra.mxu0 0.0
    %94 = vmatpush.msra.mxu0 0.0
    %95 = vmatpush.msra.mxu0 0.0
    %96 = vmatpush.msra.mxu0 %v59
    %97 = vmatpush.msra.mxu0 %v58
    %98 = vmatpush.msra.mxu0 %v57
    %99 = vmatpush.msra.mxu0 %v56
    %100 = vmatpush.msra.mxu0 %v55
    %101 = vmatpush.msra.mxu0 %v54
    %102 = vmatpush.msra.mxu0 %v53
    %103 = vmatmul.f32.gmra.mxu0 %v82
    %v104 = vpop.f32.mrf.mxu0
    %v105 = vadd.f32 0.0, %v104
    %106 = vmatmul.f32.gmra.mxu0 %v85
    %v107 = vpop.f32.mrf.mxu0
    %v108 = vadd.f32 0.0, %v107
    %109 = vdwg.mxu0
    %v110 = vld [vmem:[%s1] sm:$0x3]
    %111 = vset.pattern.permute.xlu0 0
    %112 = vperm.xlu0 %111, %v110
    %v113 = vpop.permute.xlu0 %112
    %vm114 = vcmp.lt.s32.totalorder %v67, %v113
    %vm115 = vcmask 261120
    %v117 = vsel %vm115, 0.0, 0
    %119 = vmatpush.msra.mxu0 0.0
    %120 = vmatpush.msra.mxu0 0.0
    %121 = vmatpush.msra.mxu0 0.0
    %122 = vmatpush.msra.mxu0 0.0
    %123 = vmatpush.msra.mxu0 0.0
    %124 = vmatpush.msra.mxu0 0.0
    %125 = vmatpush.msra.mxu0 0.0
    %126 = vmatpush.msra.mxu0 0.0
    %127 = vmatpush.msra.mxu0 0.0
    %128 = vmatpush.msra.mxu0 0.0
    %129 = vmatpush.msra.mxu0 0.0
    %130 = vmatpush.msra.mxu0 0.0
    %131 = vmatpush.msra.mxu0 %v63
    %132 = vmatpush.msra.mxu0 %v62
    %133 = vmatpush.msra.mxu0 %v61
    %134 = vmatpush.msra.mxu0 %v60
    %135 = vmatmul.f32.gmra.mxu0 %v117
    %v136 = vpop.f32.mrf.mxu0
    %v137 = vadd.f32 0.0, %v136
    %138 = vdwg.mxu0
    %v139 = vadd.f32 %v105, %v137
    %v140 = vxor.u32 %v139, 2147483648
    %v141 = vmul.f32 %v140, 1.442695
    %v142 = vpow.pop %v141
    %v143 = vadd.f32 %v142, 1.0
    %v144 = vrcp.pop %v143
    %v145 = vmul.f32 %v143, %v144
    %v146 = vsub.f32 1.0, %v145
    %v147 = vmul.f32 %v144, %v146
    %v148 = vadd.f32 %v144, %v147
    %vm149 = vweird.f32 %v143
    %vm150 = vweird.f32 %v144
    %vm151 = vmor %vm149, %vm150
    %v152 = vsel %vm151, %v144, %v148
    %v153 = vand.u32 2147483647, %v143
    %vm154 = vcmp.eq.f32.partialorder %v153, 8.507059e+37
    %v155 = vand.u32 %v143, 2147483648
    %v156 = vor.u32 1.1754944e-38, %v155
    %v157 = vsel %vm154, %v156, %v152
    %v158 = vmul.f32 1.0, %v157
    %v159 = vtanh.pop %v139
    %v160 = vmul.f32 %v158, 0.0
    %162 = vrot.lane.b32.xlu0 %v159, 64
    %v163 = vpop.permute.xlu0 %162
    %v165 = vmul.f32 %v158, %v163
    %167 = vrot.lane.b32.xlu0 %v165, 32
    %v168 = vpop.permute.xlu0 %167
    %v170 = vadd.f32 %v160, %v168
    %v171 = vtanh.pop %v170
    %173 = vrot.lane.b32.xlu0 %v171, 64
    %v174 = vpop.permute.xlu0 %173
    %v176 = vmul.f32 %v158, %v174
    %v177 = vsel %vm114, 1, 0
    %178 = vset.pattern.permute.xlu0 0
    %179 = vperm.xlu0 %178, %v177
    %v180 = vpop.permute.xlu0 %179
    %vm181 = vcmp.eq.s32.totalorder %v180, 1
    %v182 = vsel %vm181, %v176, 0.0
    %v183 = vsel %vm181, %v170, 0.0
    %185 = vrot.lane.b32.xlu0 %v182, 32
    %v186 = vpop.permute.xlu0 %185
    %v187 = vsel %vm115, %v186, 0
    %189 = vmatpush.msra.mxu0 0.0
    %190 = vmatpush.msra.mxu0 0.0
    %191 = vmatpush.msra.mxu0 0.0
    %192 = vmatpush.msra.mxu0 0.0
    %193 = vmatpush.msra.mxu0 0.0
    %194 = vmatpush.msra.mxu0 0.0
    %195 = vmatpush.msra.mxu0 0.0
    %196 = vmatpush.msra.mxu0 0.0
    %197 = vmatpush.msra.mxu0 0.0
    %198 = vmatpush.msra.mxu0 0.0
    %199 = vmatpush.msra.mxu0 0.0
    %200 = vmatpush.msra.mxu0 0.0
    %201 = vmatpush.msra.mxu0 %v63
    %202 = vmatpush.msra.mxu0 %v62
    %203 = vmatpush.msra.mxu0 %v61
    %204 = vmatpush.msra.mxu0 %v60
    %205 = vmatmul.f32.gmra.mxu0 %v187
    %v206 = vpop.f32.mrf.mxu0
    %v207 = vadd.f32 0.0, %v206
    %208 = vdwg.mxu0
    %v210 = vrot.slane %v207, 6
    %v212 = vadd.f32 %v105, %v210
    %v213 = vxor.u32 %v212, 2147483648
    %v214 = vmul.f32 %v213, 1.442695
    %v215 = vpow.pop %v214
    %v216 = vadd.f32 %v215, 1.0
    %v217 = vrcp.pop %v216
    %v218 = vmul.f32 %v216, %v217
    %v219 = vsub.f32 1.0, %v218
    %v220 = vmul.f32 %v217, %v219
    %v221 = vadd.f32 %v217, %v220
    %vm222 = vweird.f32 %v216
    %vm223 = vweird.f32 %v217
    %vm224 = vmor %vm222, %vm223
    %v225 = vsel %vm224, %v217, %v221
    %v226 = vand.u32 2147483647, %v216
    %vm227 = vcmp.eq.f32.partialorder %v226, 8.507059e+37
    %v228 = vand.u32 %v216, 2147483648
    %v229 = vor.u32 1.1754944e-38, %v228
    %v230 = vsel %vm227, %v229, %v225
    %v231 = vmul.f32 1.0, %v230
    %v232 = vtanh.pop %v212
    %v234 = vrot.slane %v183, 6
    %v236 = vmul.f32 %v231, %v234
    %238 = vrot.lane.b32.xlu0 %v232, 64
    %v239 = vpop.permute.xlu0 %238
    %v241 = vmul.f32 %v231, %v239
    %243 = vrot.lane.b32.xlu0 %v241, 32
    %v244 = vpop.permute.xlu0 %243
    %v246 = vadd.f32 %v236, %v244
    %v247 = vtanh.pop %v246
    %249 = vrot.lane.b32.xlu0 %v247, 64
    %v250 = vpop.permute.xlu0 %249
    %v252 = vmul.f32 %v231, %v250
    %253 = vset.pattern.permute.xlu0 1
    %254 = vperm.xlu0 %253, %v177
    %v255 = vpop.permute.xlu0 %254
    %vm256 = vcmp.eq.s32.totalorder %v255, 1
    %v258 = vrot.slane %v252, 2
    %259 = vrot.lane.b32.xlu0 %v258, 32
    %v260 = vpop.permute.xlu0 %259
    %v263 = vsel %vm256, %v260, %v186
    %v265 = vrot.slane %v246, 2
    %266 = vrot.lane.b32.xlu0 %v265, 96
    %v267 = vpop.permute.xlu0 %266
    %269 = vrot.lane.b32.xlu0 %v183, 96
    %v270 = vpop.permute.xlu0 %269
    %v272 = vsel %vm256, %v267, %v270
    %v274 = vsel %vm115, %v263, 0
    %276 = vmatpush.msra.mxu0 0.0
    %277 = vmatpush.msra.mxu0 0.0
    %278 = vmatpush.msra.mxu0 0.0
    %279 = vmatpush.msra.mxu0 0.0
    %280 = vmatpush.msra.mxu0 0.0
    %281 = vmatpush.msra.mxu0 0.0
    %282 = vmatpush.msra.mxu0 0.0
    %283 = vmatpush.msra.mxu0 0.0
    %284 = vmatpush.msra.mxu0 0.0
    %285 = vmatpush.msra.mxu0 0.0
    %286 = vmatpush.msra.mxu0 0.0
    %287 = vmatpush.msra.mxu0 0.0
    %288 = vmatpush.msra.mxu0 %v63
    %289 = vmatpush.msra.mxu0 %v62
    %290 = vmatpush.msra.mxu0 %v61
    %291 = vmatpush.msra.mxu0 %v60
    %292 = vmatmul.f32.gmra.mxu0 %v274
    %v293 = vpop.f32.mrf.mxu0
    %v294 = vadd.f32 0.0, %v293
    %295 = vdwg.mxu0
    %v297 = vrot.slane %v294, 4
    %v299 = vadd.f32 %v105, %v297
    %v300 = vxor.u32 %v299, 2147483648
    %v301 = vmul.f32 %v300, 1.442695
    %v302 = vpow.pop %v301
    %v303 = vadd.f32 %v302, 1.0
    %v304 = vrcp.pop %v303
    %v305 = vmul.f32 %v303, %v304
    %v306 = vsub.f32 1.0, %v305
    %v307 = vmul.f32 %v304, %v306
    %v308 = vadd.f32 %v304, %v307
    %vm309 = vweird.f32 %v303
    %vm310 = vweird.f32 %v304
    %vm311 = vmor %vm309, %vm310
    %v312 = vsel %vm311, %v304, %v308
    %v313 = vand.u32 2147483647, %v303
    %vm314 = vcmp.eq.f32.partialorder %v313, 8.507059e+37
    %v315 = vand.u32 %v303, 2147483648
    %v316 = vor.u32 1.1754944e-38, %v315
    %v317 = vsel %vm314, %v316, %v312
    %v318 = vmul.f32 1.0, %v317
    %v319 = vtanh.pop %v299
    %v321 = vrot.slane %v272, 4
    %322 = vrot.lane.b32.xlu0 %v321, 32
    %v323 = vpop.permute.xlu0 %322
    %v325 = vmul.f32 %v318, %v323
    %327 = vrot.lane.b32.xlu0 %v319, 64
    %v328 = vpop.permute.xlu0 %327
    %v330 = vmul.f32 %v318, %v328
    %332 = vrot.lane.b32.xlu0 %v330, 32
    %v333 = vpop.permute.xlu0 %332
    %v335 = vadd.f32 %v325, %v333
    %v336 = vtanh.pop %v335
    %338 = vrot.lane.b32.xlu0 %v336, 64
    %v339 = vpop.permute.xlu0 %338
    %v341 = vmul.f32 %v318, %v339
    %342 = vset.pattern.permute.xlu0 2
    %343 = vperm.xlu0 %342, %v177
    %v344 = vpop.permute.xlu0 %343
    %vm345 = vcmp.eq.s32.totalorder %v344, 1
    %v347 = vrot.slane %v341, 4
    %348 = vrot.lane.b32.xlu0 %v347, 32
    %v349 = vpop.permute.xlu0 %348
    %v351 = vsel %vm345, %v349, %v263
    %v353 = vrot.slane %v335, 4
    %354 = vrot.lane.b32.xlu0 %v353, 96
    %v355 = vpop.permute.xlu0 %354
    %v357 = vsel %vm345, %v355, %v272
    %v359 = vsel %vm115, %v351, 0
    %361 = vmatpush.msra.mxu0 0.0
    %362 = vmatpush.msra.mxu0 0.0
    %363 = vmatpush.msra.mxu0 0.0
    %364 = vmatpush.msra.mxu0 0.0
    %365 = vmatpush.msra.mxu0 0.0
    %366 = vmatpush.msra.mxu0 0.0
    %367 = vmatpush.msra.mxu0 0.0
    %368 = vmatpush.msra.mxu0 0.0
    %369 = vmatpush.msra.mxu0 0.0
    %370 = vmatpush.msra.mxu0 0.0
    %371 = vmatpush.msra.mxu0 0.0
    %372 = vmatpush.msra.mxu0 0.0
    %373 = vmatpush.msra.mxu0 %v63
    %374 = vmatpush.msra.mxu0 %v62
    %375 = vmatpush.msra.mxu0 %v61
    %376 = vmatpush.msra.mxu0 %v60
    %377 = vmatmul.f32.gmra.mxu0 %v359
    %v378 = vpop.f32.mrf.mxu0
    %v379 = vadd.f32 0.0, %v378
    %380 = vdwg.mxu0
    %v382 = vrot.slane %v379, 2
    %v384 = vadd.f32 %v105, %v382
    %v385 = vxor.u32 %v384, 2147483648
    %v386 = vmul.f32 %v385, 1.442695
    %v387 = vpow.pop %v386
    %v388 = vadd.f32 %v387, 1.0
    %v389 = vrcp.pop %v388
    %v390 = vmul.f32 %v388, %v389
    %v391 = vsub.f32 1.0, %v390
    %v392 = vmul.f32 %v389, %v391
    %v393 = vadd.f32 %v389, %v392
    %vm394 = vweird.f32 %v388
    %vm395 = vweird.f32 %v389
    %vm396 = vmor %vm394, %vm395
    %v397 = vsel %vm396, %v389, %v393
    %v398 = vand.u32 2147483647, %v388
    %vm399 = vcmp.eq.f32.partialorder %v398, 8.507059e+37
    %v400 = vand.u32 %v388, 2147483648
    %v401 = vor.u32 1.1754944e-38, %v400
    %v402 = vsel %vm399, %v401, %v397
    %v403 = vmul.f32 1.0, %v402
    %v404 = vtanh.pop %v384
    %v406 = vrot.slane %v357, 2
    %407 = vrot.lane.b32.xlu0 %v406, 32
    %v408 = vpop.permute.xlu0 %407
    %v410 = vmul.f32 %v403, %v408
    %412 = vrot.lane.b32.xlu0 %v404, 64
    %v413 = vpop.permute.xlu0 %412
    %v415 = vmul.f32 %v403, %v413
    %417 = vrot.lane.b32.xlu0 %v415, 32
    %v418 = vpop.permute.xlu0 %417
    %v420 = vadd.f32 %v410, %v418
    %v421 = vtanh.pop %v420
    %423 = vrot.lane.b32.xlu0 %v421, 64
    %v424 = vpop.permute.xlu0 %423
    %v426 = vmul.f32 %v403, %v424
    %427 = vset.pattern.permute.xlu0 3
    %428 = vperm.xlu0 %427, %v177
    %v429 = vpop.permute.xlu0 %428
    %vm430 = vcmp.eq.s32.totalorder %v429, 1
    %v432 = vrot.slane %v426, 6
    %433 = vrot.lane.b32.xlu0 %v432, 32
    %v434 = vpop.permute.xlu0 %433
    %v436 = vsel %vm430, %v434, %v351
    %v438 = vrot.slane %v420, 6
    %439 = vrot.lane.b32.xlu0 %v438, 96
    %v440 = vpop.permute.xlu0 %439
    %v442 = vsel %vm430, %v440, %v357
    %v444 = vsel %vm115, %v436, 0
    %446 = vmatpush.msra.mxu0 0.0
    %447 = vmatpush.msra.mxu0 0.0
    %448 = vmatpush.msra.mxu0 0.0
    %449 = vmatpush.msra.mxu0 0.0
    %450 = vmatpush.msra.mxu0 0.0
    %451 = vmatpush.msra.mxu0 0.0
    %452 = vmatpush.msra.mxu0 0.0
    %453 = vmatpush.msra.mxu0 0.0
    %454 = vmatpush.msra.mxu0 0.0
    %455 = vmatpush.msra.mxu0 0.0
    %456 = vmatpush.msra.mxu0 0.0
    %457 = vmatpush.msra.mxu0 0.0
    %458 = vmatpush.msra.mxu0 %v63
    %459 = vmatpush.msra.mxu0 %v62
    %460 = vmatpush.msra.mxu0 %v61
    %461 = vmatpush.msra.mxu0 %v60
    %462 = vmatmul.f32.gmra.mxu0 %v444
    %v463 = vpop.f32.mrf.mxu0
    %v464 = vadd.f32 0.0, %v463
    %465 = vdwg.mxu0
    %v466 = vadd.f32 %v108, %v464
    %v467 = vxor.u32 %v466, 2147483648
    %v468 = vmul.f32 %v467, 1.442695
    %v469 = vpow.pop %v468
    %v470 = vadd.f32 %v469, 1.0
    %v471 = vrcp.pop %v470
    %v472 = vmul.f32 %v470, %v471
    %v473 = vsub.f32 1.0, %v472
    %v474 = vmul.f32 %v471, %v473
    %v475 = vadd.f32 %v471, %v474
    %vm476 = vweird.f32 %v470
    %vm477 = vweird.f32 %v471
    %vm478 = vmor %vm476, %vm477
    %v479 = vsel %vm478, %v471, %v475
    %v480 = vand.u32 2147483647, %v470
    %vm481 = vcmp.eq.f32.partialorder %v480, 8.507059e+37
    %v482 = vand.u32 %v470, 2147483648
    %v483 = vor.u32 1.1754944e-38, %v482
    %v484 = vsel %vm481, %v483, %v479
    %v485 = vmul.f32 1.0, %v484
    %v486 = vtanh.pop %v466
    %488 = vrot.lane.b32.xlu0 %v442, 32
    %v489 = vpop.permute.xlu0 %488
    %v491 = vmul.f32 %v485, %v489
    %493 = vrot.lane.b32.xlu0 %v486, 64
    %v494 = vpop.permute.xlu0 %493
    %v496 = vmul.f32 %v485, %v494
    %498 = vrot.lane.b32.xlu0 %v496, 32
    %v499 = vpop.permute.xlu0 %498
    %v501 = vadd.f32 %v491, %v499
    %v502 = vtanh.pop %v501
    %504 = vrot.lane.b32.xlu0 %v502, 64
    %v505 = vpop.permute.xlu0 %504
    %v507 = vmul.f32 %v485, %v505
    %508 = vset.pattern.permute.xlu0 4
    %509 = vperm.xlu0 %508, %v177
    %v510 = vpop.permute.xlu0 %509
    %vm511 = vcmp.eq.s32.totalorder %v510, 1
    %512 = vrot.lane.b32.xlu0 %v436, 96
    %v513 = vpop.permute.xlu0 %512
    %v515 = vsel %vm511, %v507, %v513
    %v516 = vsel %vm511, %v501, %v489
    %518 = vrot.lane.b32.xlu0 %v515, 32
    %v519 = vpop.permute.xlu0 %518
    %v520 = vsel %vm115, %v519, 0
    %522 = vmatpush.msra.mxu0 0.0
    %523 = vmatpush.msra.mxu0 0.0
    %524 = vmatpush.msra.mxu0 0.0
    %525 = vmatpush.msra.mxu0 0.0
    %526 = vmatpush.msra.mxu0 0.0
    %527 = vmatpush.msra.mxu0 0.0
    %528 = vmatpush.msra.mxu0 0.0
    %529 = vmatpush.msra.mxu0 0.0
    %530 = vmatpush.msra.mxu0 0.0
    %531 = vmatpush.msra.mxu0 0.0
    %532 = vmatpush.msra.mxu0 0.0
    %533 = vmatpush.msra.mxu0 0.0
    %534 = vmatpush.msra.mxu0 %v63
    %535 = vmatpush.msra.mxu0 %v62
    %536 = vmatpush.msra.mxu0 %v61
    %537 = vmatpush.msra.mxu0 %v60
    %538 = vmatmul.f32.gmra.mxu0 %v520
    %v539 = vpop.f32.mrf.mxu0
    %v540 = vadd.f32 0.0, %v539
    %541 = vdwg.mxu0
    %v543 = vrot.slane %v540, 6
    %v545 = vadd.f32 %v108, %v543
    %v546 = vxor.u32 %v545, 2147483648
    %v547 = vmul.f32 %v546, 1.442695
    %v548 = vpow.pop %v547
    %v549 = vadd.f32 %v548, 1.0
    %v550 = vrcp.pop %v549
    %v551 = vmul.f32 %v549, %v550
    %v552 = vsub.f32 1.0, %v551
    %v553 = vmul.f32 %v550, %v552
    %v554 = vadd.f32 %v550, %v553
    %vm555 = vweird.f32 %v549
    %vm556 = vweird.f32 %v550
    %vm557 = vmor %vm555, %vm556
    %v558 = vsel %vm557, %v550, %v554
    %v559 = vand.u32 2147483647, %v549
    %vm560 = vcmp.eq.f32.partialorder %v559, 8.507059e+37
    %v561 = vand.u32 %v549, 2147483648
    %v562 = vor.u32 1.1754944e-38, %v561
    %v563 = vsel %vm560, %v562, %v558
    %v564 = vmul.f32 1.0, %v563
    %v565 = vtanh.pop %v545
    %v567 = vrot.slane %v516, 6
    %v569 = vmul.f32 %v564, %v567
    %571 = vrot.lane.b32.xlu0 %v565, 64
    %v572 = vpop.permute.xlu0 %571
    %v574 = vmul.f32 %v564, %v572
    %576 = vrot.lane.b32.xlu0 %v574, 32
    %v577 = vpop.permute.xlu0 %576
    %v579 = vadd.f32 %v569, %v577
    %v580 = vtanh.pop %v579
    %582 = vrot.lane.b32.xlu0 %v580, 64
    %v583 = vpop.permute.xlu0 %582
    %v585 = vmul.f32 %v564, %v583
    %586 = vset.pattern.permute.xlu0 5
    %587 = vperm.xlu0 %586, %v177
    %v588 = vpop.permute.xlu0 %587
    %vm589 = vcmp.eq.s32.totalorder %v588, 1
    %v591 = vrot.slane %v585, 2
    %592 = vrot.lane.b32.xlu0 %v591, 32
    %v593 = vpop.permute.xlu0 %592
    %v596 = vsel %vm589, %v593, %v519
    %v598 = vrot.slane %v579, 2
    %599 = vrot.lane.b32.xlu0 %v598, 96
    %v600 = vpop.permute.xlu0 %599
    %602 = vrot.lane.b32.xlu0 %v516, 96
    %v603 = vpop.permute.xlu0 %602
    %v605 = vsel %vm589, %v600, %v603
    %v607 = vsel %vm115, %v596, 0
    %609 = vmatpush.msra.mxu0 0.0
    %610 = vmatpush.msra.mxu0 0.0
    %611 = vmatpush.msra.mxu0 0.0
    %612 = vmatpush.msra.mxu0 0.0
    %613 = vmatpush.msra.mxu0 0.0
    %614 = vmatpush.msra.mxu0 0.0
    %615 = vmatpush.msra.mxu0 0.0
    %616 = vmatpush.msra.mxu0 0.0
    %617 = vmatpush.msra.mxu0 0.0
    %618 = vmatpush.msra.mxu0 0.0
    %619 = vmatpush.msra.mxu0 0.0
    %620 = vmatpush.msra.mxu0 0.0
    %621 = vmatpush.msra.mxu0 %v63
    %622 = vmatpush.msra.mxu0 %v62
    %623 = vmatpush.msra.mxu0 %v61
    %624 = vmatpush.msra.mxu0 %v60
    %625 = vmatmul.f32.gmra.mxu0 %v607
    %v626 = vpop.f32.mrf.mxu0
    %v627 = vadd.f32 0.0, %v626
    %628 = vdwg.mxu0
    %v630 = vrot.slane %v627, 4
    %v632 = vadd.f32 %v108, %v630
    %v633 = vxor.u32 %v632, 2147483648
    %v634 = vmul.f32 %v633, 1.442695
    %v635 = vpow.pop %v634
    %v636 = vadd.f32 %v635, 1.0
    %v637 = vrcp.pop %v636
    %v638 = vmul.f32 %v636, %v637
    %v639 = vsub.f32 1.0, %v638
    %v640 = vmul.f32 %v637, %v639
    %v641 = vadd.f32 %v637, %v640
    %vm642 = vweird.f32 %v636
    %vm643 = vweird.f32 %v637
    %vm644 = vmor %vm642, %vm643
    %v645 = vsel %vm644, %v637, %v641
    %v646 = vand.u32 2147483647, %v636
    %vm647 = vcmp.eq.f32.partialorder %v646, 8.507059e+37
    %v648 = vand.u32 %v636, 2147483648
    %v649 = vor.u32 1.1754944e-38, %v648
    %v650 = vsel %vm647, %v649, %v645
    %v651 = vmul.f32 1.0, %v650
    %v652 = vtanh.pop %v632
    %v654 = vrot.slane %v605, 4
    %655 = vrot.lane.b32.xlu0 %v654, 32
    %v656 = vpop.permute.xlu0 %655
    %v658 = vmul.f32 %v651, %v656
    %660 = vrot.lane.b32.xlu0 %v652, 64
    %v661 = vpop.permute.xlu0 %660
    %v663 = vmul.f32 %v651, %v661
    %665 = vrot.lane.b32.xlu0 %v663, 32
    %v666 = vpop.permute.xlu0 %665
    %v668 = vadd.f32 %v658, %v666
    %v669 = vtanh.pop %v668
    %671 = vrot.lane.b32.xlu0 %v669, 64
    %v672 = vpop.permute.xlu0 %671
    %v674 = vmul.f32 %v651, %v672
    %675 = vset.pattern.permute.xlu0 6
    %676 = vperm.xlu0 %675, %v177
    %v677 = vpop.permute.xlu0 %676
    %vm678 = vcmp.eq.s32.totalorder %v677, 1
    %v680 = vrot.slane %v674, 4
    %681 = vrot.lane.b32.xlu0 %v680, 32
    %v682 = vpop.permute.xlu0 %681
    %v684 = vsel %vm678, %v682, %v596
    %v686 = vrot.slane %v668, 4
    %687 = vrot.lane.b32.xlu0 %v686, 96
    %v688 = vpop.permute.xlu0 %687
    %v690 = vsel %vm678, %v688, %v605
    %v692 = vsel %vm115, %v684, 0
    %694 = vmatpush.msra.mxu0 0.0
    %695 = vmatpush.msra.mxu0 0.0
    %696 = vmatpush.msra.mxu0 0.0
    %697 = vmatpush.msra.mxu0 0.0
    %698 = vmatpush.msra.mxu0 0.0
    %699 = vmatpush.msra.mxu0 0.0
    %700 = vmatpush.msra.mxu0 0.0
    %701 = vmatpush.msra.mxu0 0.0
    %702 = vmatpush.msra.mxu0 0.0
    %703 = vmatpush.msra.mxu0 0.0
    %704 = vmatpush.msra.mxu0 0.0
    %705 = vmatpush.msra.mxu0 0.0
    %706 = vmatpush.msra.mxu0 %v63
    %707 = vmatpush.msra.mxu0 %v62
    %708 = vmatpush.msra.mxu0 %v61
    %709 = vmatpush.msra.mxu0 %v60
    %710 = vmatmul.f32.gmra.mxu0 %v692
    %v711 = vpop.f32.mrf.mxu0
    %v712 = vadd.f32 0.0, %v711
    %713 = vdwg.mxu0
    %v715 = vrot.slane %v712, 2
    %v717 = vadd.f32 %v108, %v715
    %v718 = vxor.u32 %v717, 2147483648
    %v719 = vmul.f32 %v718, 1.442695
    %v720 = vpow.pop %v719
    %v721 = vadd.f32 %v720, 1.0
    %v722 = vrcp.pop %v721
    %v723 = vmul.f32 %v721, %v722
    %v724 = vsub.f32 1.0, %v723
    %v725 = vmul.f32 %v722, %v724
    %v726 = vadd.f32 %v722, %v725
    %vm727 = vweird.f32 %v721
    %vm728 = vweird.f32 %v722
    %vm729 = vmor %vm727, %vm728
    %v730 = vsel %vm729, %v722, %v726
    %v731 = vand.u32 2147483647, %v721
    %vm732 = vcmp.eq.f32.partialorder %v731, 8.507059e+37
    %v733 = vand.u32 %v721, 2147483648
    %v734 = vor.u32 1.1754944e-38, %v733
    %v735 = vsel %vm732, %v734, %v730
    %v736 = vmul.f32 1.0, %v735
    %v737 = vtanh.pop %v717
    %v739 = vrot.slane %v690, 2
    %740 = vrot.lane.b32.xlu0 %v739, 32
    %v741 = vpop.permute.xlu0 %740
    %v743 = vmul.f32 %v736, %v741
    %745 = vrot.lane.b32.xlu0 %v737, 64
    %v746 = vpop.permute.xlu0 %745
    %v748 = vmul.f32 %v736, %v746
    %750 = vrot.lane.b32.xlu0 %v748, 32
    %v751 = vpop.permute.xlu0 %750
    %v753 = vadd.f32 %v743, %v751
    %v754 = vtanh.pop %v753
    %756 = vrot.lane.b32.xlu0 %v754, 64
    %v757 = vpop.permute.xlu0 %756
    %v759 = vmul.f32 %v736, %v757
    %760 = vset.pattern.permute.xlu0 7
    %761 = vperm.xlu0 %760, %v177
    %v762 = vpop.permute.xlu0 %761
    %vm763 = vcmp.eq.s32.totalorder %v762, 1
    %v765 = vrot.slane %v759, 6
    %766 = vrot.lane.b32.xlu0 %v765, 32
    %v767 = vpop.permute.xlu0 %766
    %v769 = vsel %vm763, %v767, %v684
    %v770 = vld [vmem:[#allocation5] sm:$0xff]
    %v771 = vld [vmem:[#allocation5 + $0x8] sm:$0xff]
    %v772 = vld [vmem:[#allocation5 + $0x10] sm:$0xff]
    %v773 = vld [vmem:[#allocation5 + $0x18] sm:$0xff]
    %v774 = vld [vmem:[%s4] sm:$0x1]
    %v776 = vperm.slane %v774, 0
    %v779 = vsel %vm115, %v769, 0
    %781 = vmatpush.msra.mxu0 0.0
    %782 = vmatpush.msra.mxu0 0.0
    %783 = vmatpush.msra.mxu0 0.0
    %784 = vmatpush.msra.mxu0 0.0
    %785 = vmatpush.msra.mxu0 0.0
    %786 = vmatpush.msra.mxu0 0.0
    %787 = vmatpush.msra.mxu0 0.0
    %788 = vmatpush.msra.mxu0 0.0
    %789 = vmatpush.msra.mxu0 0.0
    %790 = vmatpush.msra.mxu0 0.0
    %791 = vmatpush.msra.mxu0 0.0
    %792 = vmatpush.msra.mxu0 0.0
    %793 = vmatpush.msra.mxu0 %v773
    %794 = vmatpush.msra.mxu0 %v772
    %795 = vmatpush.msra.mxu0 %v771
    %796 = vmatpush.msra.mxu0 %v770
    %797 = vmatmul.f32.gmra.mxu0 %v779
    %v798 = vpop.f32.mrf.mxu0
    %v799 = vadd.f32 %v776, %v798
    %800 = vdwg.mxu0
    %v801 = vmax.f32 %v799, 0.0
    %806 = vrot.lane.b32.xlu0 %v770, 96
    %v807 = vpop.permute.xlu0 %806
    %808 = vrot.lane.b32.xlu0 %v771, 96
    %v809 = vpop.permute.xlu0 %808
    %810 = vrot.lane.b32.xlu0 %v772, 96
    %v811 = vpop.permute.xlu0 %810
    %812 = vrot.lane.b32.xlu0 %v773, 96
    %v813 = vpop.permute.xlu0 %812
    %818 = vrot.lane.b32.xlu0 %v776, 96
    %v819 = vpop.permute.xlu0 %818
    %v822 = vsel %vm115, %v801, 0
    %824 = vmatpush.msra.mxu0 0.0
    %825 = vmatpush.msra.mxu0 0.0
    %826 = vmatpush.msra.mxu0 0.0
    %827 = vmatpush.msra.mxu0 0.0
    %828 = vmatpush.msra.mxu0 0.0
    %829 = vmatpush.msra.mxu0 0.0
    %830 = vmatpush.msra.mxu0 0.0
    %831 = vmatpush.msra.mxu0 0.0
    %832 = vmatpush.msra.mxu0 0.0
    %833 = vmatpush.msra.mxu0 0.0
    %834 = vmatpush.msra.mxu0 0.0
    %835 = vmatpush.msra.mxu0 0.0
    %836 = vmatpush.msra.mxu0 %v813
    %837 = vmatpush.msra.mxu0 %v811
    %838 = vmatpush.msra.mxu0 %v809
    %839 = vmatpush.msra.mxu0 %v807
    %840 = vmatmul.f32.gmra.mxu0 %v822
    %v841 = vpop.f32.mrf.mxu0
    %v842 = vadd.f32 %v819, %v841
    %843 = vdwg.mxu0
    %v844 = vmax.f32 %v842, 0.0
    %845 = vrot.lane.b32.xlu0 %v770, 64
    %v846 = vpop.permute.xlu0 %845
    %847 = vrot.lane.b32.xlu0 %v771, 64
    %v848 = vpop.permute.xlu0 %847
    %849 = vrot.lane.b32.xlu0 %v772, 64
    %v850 = vpop.permute.xlu0 %849
    %851 = vrot.lane.b32.xlu0 %v773, 64
    %v852 = vpop.permute.xlu0 %851
    %857 = vrot.lane.b32.xlu0 %v776, 64
    %v858 = vpop.permute.xlu0 %857
    %v861 = vsel %vm115, %v844, 0
    %863 = vmatpush.msra.mxu0 0.0
    %864 = vmatpush.msra.mxu0 0.0
    %865 = vmatpush.msra.mxu0 0.0
    %866 = vmatpush.msra.mxu0 0.0
    %867 = vmatpush.msra.mxu0 0.0
    %868 = vmatpush.msra.mxu0 0.0
    %869 = vmatpush.msra.mxu0 0.0
    %870 = vmatpush.msra.mxu0 0.0
    %871 = vmatpush.msra.mxu0 0.0
    %872 = vmatpush.msra.mxu0 0.0
    %873 = vmatpush.msra.mxu0 0.0
    %874 = vmatpush.msra.mxu0 0.0
    %875 = vmatpush.msra.mxu0 %v852
    %876 = vmatpush.msra.mxu0 %v850
    %877 = vmatpush.msra.mxu0 %v848
    %878 = vmatpush.msra.mxu0 %v846
    %879 = vmatmul.f32.gmra.mxu0 %v861
    %v880 = vpop.f32.mrf.mxu0
    %v881 = vadd.f32 %v858, %v880
    %882 = vdwg.mxu0
    %vm883 = vcmask 58368
    %884 = vst.msk [vmem:[#allocation7] sm:$0x3] %vm883, %v881
    // Predicated region
    $region30: #{tpu_custom_call.1} parent=1 // pred_check
      _
    $region31: #{tpu_custom_call.1} parent=1 // pred_check_branch
      %886 = sbr.rel (0) target = $region33
    $region32: #{tpu_custom_call.1} parent=1 // pred_region
      %888 = vsyncadd [#allocation4], 0
      %s890 = sshll.u32 [#allocation7], 4
      %s891 = int_to_ptr.vmem [resolvable:$true] %s890
      %s892 = sshll.u32 %s5, 4
      %s893 = int_to_ptr.hbm [resolvable:$true] %s892
      %895 = dma.vmem_to_hbm [thread:$0]  %s891, 32, %s893, [#allocation4]
    $region33: #{tpu_custom_call.1} parent=1 // pred_fallthru
      _
    // Predicated region
    $region34: #{tpu_custom_call.1} parent=1 // pred_check
      _
    $region35: #{tpu_custom_call.1} parent=1 // pred_check_branch
      %897 = sbr.rel (0) target = $region37
    $region36: #{tpu_custom_call.1} parent=1 // pred_region
      %899 = dma.done [#allocation4], 32
    $region37: #{tpu_custom_call.1} parent=1 // pred_fallthru
      _
    %900 = vsyncpa [#allocation3], 1
    %901 = vsyncpa [#allocation6], 1
    %902 = vsyncpa [#allocation4], 1

</llo_original>
